<compile_context>
chip_gen: v6e
topology: v6e:2x2x1
jax: 0.10.0
libtpu: 0.0.40
codegen_flags: <defaults>
</compile_context>

<pallas_src>
import functools
import math

import jax
import jax.numpy as jnp
from jax.experimental import pallas as pl
from jax.experimental.pallas import tpu as pltpu

_LANES = 128
_TARGET_BLOCK_BYTES = 2 * 1024 * 1024   # per-input block (x2 inputs x2 buffers ~ 8 MiB)


def _soft_dice_kernel(logits_ref, targets_ref, inter_ref, s1_ref, s2_ref, *,
                      rows_total: int, rows_per_chunk: int,
                      chunks_per_split: int, mask_rows: bool):
    c = pl.program_id(0)          # core-split axis ("parallel")
    k = pl.program_id(1)          # reduction axis over row-chunks ("arbitrary")

    @pl.when(k == 0)
    def _init():
        inter_ref[...] = jnp.zeros_like(inter_ref)
        s1_ref[...] = jnp.zeros_like(s1_ref)
        s2_ref[...] = jnp.zeros_like(s2_ref)

    # Hot path: cast in-register, sigmoid (EUP), multiply + adds (VPU).
    x = logits_ref[...].astype(jnp.float32)       # (N, R, 128)
    t = targets_ref[...].astype(jnp.float32)
    probs = jax.nn.sigmoid(x)

    if mask_rows:
        # Only needed (statically) when `rows` is not a multiple of the chunk
        # size: zero out rows of the boundary block that lie past real data.
        chunk = c * chunks_per_split + k
        row = jax.lax.broadcasted_iota(jnp.int32, x.shape, 1)
        valid = (chunk * rows_per_chunk + row) < rows_total
        probs = jnp.where(valid, probs, 0.0)
        t = jnp.where(valid, t, 0.0)

    # Lane-partial accumulation (keeps the 128-lane axis; no cross-lane work
    # in the hot loop).  Output blocks are VMEM-resident across the k axis.
    inter_ref[0] = inter_ref[0] + jnp.sum(probs * t, axis=1)
    s1_ref[0] = s1_ref[0] + jnp.sum(probs, axis=1)
    s2_ref[0] = s2_ref[0] + jnp.sum(t, axis=1)


def soft_dice_loss(logits, targets, smooth: float = 1.0):
    """Pallas TPU implementation of SoftDiceLoss.forward.

    logits, targets: same shape, leading axis = batch (e.g. NCHW).
    Returns a scalar float32 loss.
    """
    num = logits.shape[0]
    d = int(math.prod(logits.shape[1:]))

    rows = pl.cdiv(d, _LANES)
    d_pad = rows * _LANES

    l2 = logits.reshape(num, d)
    t2 = targets.reshape(num, d)
    if d_pad != d:
        # Rare fallback: pad the feature axis up to a multiple of 128 lanes.
        # logits pad -> sigmoid == 0 and targets pad == 0, so the padded lanes
        # contribute exactly nothing to any of the three sums.
        # TODO(synk): replace this extra HBM pass with an in-kernel lane mask.
        l2 = jnp.pad(l2, ((0, 0), (0, d_pad - d)), constant_values=-30000.0)
        t2 = jnp.pad(t2, ((0, 0), (0, d_pad - d)), constant_values=0.0)
    l3 = l2.reshape(num, rows, _LANES)
    t3 = t2.reshape(num, rows, _LANES)

    # Row-chunk size: multiple of 8 sublanes, sized so each input block is
    # ~2 MiB (amortizes ~0.35 us per-step overhead; 2 inputs x 2 pipeline
    # buffers stays well under v7x's 64 MiB VMEM), never larger than the array.
    esize = max(l3.dtype.itemsize, t3.dtype.itemsize)
    bytes_per_row = num * _LANES * esize
    r_cap = max(8, ((_TARGET_BLOCK_BYTES // bytes_per_row) // 8) * 8)
    if rows < 8:
        block_rows = int(rows)          # block dim == full array dim (allowed)
    else:
        block_rows = int(min(r_cap, (rows // 8) * 8))

    n_chunks = pl.cdiv(rows, block_rows)
    # Use both v7x TensorCores when the chunk count splits evenly; otherwise
    # run on one core (still correct everywhere; no-op on v5e/v6e).
    n_split = 2 if (n_chunks >= 2 and n_chunks % 2 == 0) else 1
    chunks_per_split = n_chunks // n_split
    mask_rows = (rows % block_rows) != 0

    kernel = functools.partial(
        _soft_dice_kernel,
        rows_total=int(rows),
        rows_per_chunk=int(block_rows),
        chunks_per_split=int(chunks_per_split),
        mask_rows=bool(mask_rows),
    )

    part_shape = jax.ShapeDtypeStruct((n_split, num, _LANES), jnp.float32)
    part_spec = pl.BlockSpec((1, num, _LANES), lambda c, k: (c, 0, 0))
    in_spec = pl.BlockSpec((num, block_rows, _LANES),
                           lambda c, k: (0, c * chunks_per_split + k, 0))

    inter_p, s1_p, s2_p = pl.pallas_call(
        kernel,
        out_shape=(part_shape, part_shape, part_shape),
        grid_spec=pltpu.PrefetchScalarGridSpec(
            num_scalar_prefetch=0,
            grid=(n_split, chunks_per_split),
            in_specs=[in_spec, in_spec],
            out_specs=[part_spec, part_spec, part_spec],
        ),
        compiler_params=pltpu.CompilerParams(
            dimension_semantics=("parallel", "arbitrary"),
            vmem_limit_bytes=32 * 1024 * 1024,
        ),
    )(l3, t3)

    # Tiny finalize in plain JAX: cross-lane/cross-core reduce + dice + loss.
    inter = inter_p.sum(axis=(0, 2))
    s1 = s1_p.sum(axis=(0, 2))
    s2 = s2_p.sum(axis=(0, 2))
    score = 2.0 * (inter + smooth) / (s1 + s2 + smooth)
    return (1.0 - jnp.sum(score) / num).astype(jnp.float32)


def _soft_dice_loss_ref(logits, targets, smooth=1.0):
    num = logits.shape[0]
    probs = jax.nn.sigmoid(logits.astype(jnp.float32))
    m1 = probs.reshape(num, -1)
    m2 = targets.astype(jnp.float32).reshape(num, -1)
    inter = (m1 * m2).sum(1)
    score = 2.0 * (inter + smooth) / (m1.sum(1) + m2.sum(1) + smooth)
    return 1.0 - score.sum() / num


if __name__ == "__main__":
    key = jax.random.PRNGKey(0)
    k1, k2 = jax.random.split(key)

    # Small shapes consistent with a U-Net segmentation output: N=2, C=4, 16x16.
    logits = jax.random.normal(k1, (2, 4, 16, 16), dtype=jnp.float32)
    targets = (jax.random.uniform(k2, (2, 4, 16, 16)) > 0.5).astype(jnp.float32)

    out = soft_dice_loss(logits, targets, smooth=1.0)
    out = jax.block_until_ready(out)

    ref = _soft_dice_loss_ref(logits, targets, smooth=1.0)
    assert jnp.allclose(out, ref, atol=1e-5, rtol=1e-5), (out, ref)

    print("KERNEL_OK")
</pallas_src>

<mosaic_0001>
module attributes {stable_mosaic.version = 11 : i64} {
  func.func @_soft_dice_kernel(%arg0: i32, %arg1: i32, %arg2: memref<2x8x128xf32, #tpu.memory_space<vmem>>, %arg3: memref<2x8x128xf32, #tpu.memory_space<vmem>>, %arg4: memref<1x2x128xf32, #tpu.memory_space<vmem>>, %arg5: memref<1x2x128xf32, #tpu.memory_space<vmem>>, %arg6: memref<1x2x128xf32, #tpu.memory_space<vmem>>) attributes {dimension_semantics = [#tpu.dimension_semantics<parallel>, #tpu.dimension_semantics<arbitrary>], iteration_bounds = array<i64: 1, 1>, scalar_prefetch = 0 : i64, scratch_operands = 0 : i64, tpu.core_type = #tpu.core_type<tc>, window_params = [{transform_indices = @transform_0, window_bounds = array<i64: 2, 8, 128>}, {transform_indices = @transform_1, window_bounds = array<i64: 2, 8, 128>}, {transform_indices = @transform_2, window_bounds = array<i64: 1, 2, 128>}, {transform_indices = @transform_3, window_bounds = array<i64: 1, 2, 128>}, {transform_indices = @transform_4, window_bounds = array<i64: 1, 2, 128>}]} {
    %c0_i32 = arith.constant 0 : i32
    %0 = arith.cmpi eq, %arg1, %c0_i32 : i32
    %1 = arith.extui %0 : i1 to i32
    %c0_i32_0 = arith.constant 0 : i32
    %2 = arith.cmpi ne, %1, %c0_i32_0 : i32
    scf.if %2 {
      %cst_27 = arith.constant 0.000000e+00 : f32
      %32 = vector.broadcast %cst_27 : f32 to vector<1x2x128xf32>
      %c0_28 = arith.constant 0 : index
      %c0_29 = arith.constant 0 : index
      %c0_30 = arith.constant 0 : index
      %33 = vector.load %arg4[%c0_28, %c0_29, %c0_30] : memref<1x2x128xf32, #tpu.memory_space<vmem>>, vector<1x2x128xf32>
      tpu.vector_store %arg4[%c0_28, %c0_29, %c0_30], %32 {strides = array<i32>} : memref<1x2x128xf32, #tpu.memory_space<vmem>>, vector<1x2x128xf32>,
      %cst_31 = arith.constant 0.000000e+00 : f32
      %34 = vector.broadcast %cst_31 : f32 to vector<1x2x128xf32>
      %c0_32 = arith.constant 0 : index
      %c0_33 = arith.constant 0 : index
      %c0_34 = arith.constant 0 : index
      %35 = vector.load %arg5[%c0_32, %c0_33, %c0_34] : memref<1x2x128xf32, #tpu.memory_space<vmem>>, vector<1x2x128xf32>
      tpu.vector_store %arg5[%c0_32, %c0_33, %c0_34], %34 {strides = array<i32>} : memref<1x2x128xf32, #tpu.memory_space<vmem>>, vector<1x2x128xf32>,
      %cst_35 = arith.constant 0.000000e+00 : f32
      %36 = vector.broadcast %cst_35 : f32 to vector<1x2x128xf32>
      %c0_36 = arith.constant 0 : index
      %c0_37 = arith.constant 0 : index
      %c0_38 = arith.constant 0 : index
      %37 = vector.load %arg6[%c0_36, %c0_37, %c0_38] : memref<1x2x128xf32, #tpu.memory_space<vmem>>, vector<1x2x128xf32>
      tpu.vector_store %arg6[%c0_36, %c0_37, %c0_38], %36 {strides = array<i32>} : memref<1x2x128xf32, #tpu.memory_space<vmem>>, vector<1x2x128xf32>,
    } else {
    }
    %c0 = arith.constant 0 : index
    %c0_1 = arith.constant 0 : index
    %c0_2 = arith.constant 0 : index
    %3 = vector.load %arg2[%c0, %c0_1, %c0_2] : memref<2x8x128xf32, #tpu.memory_space<vmem>>, vector<2x8x128xf32>
    %c0_3 = arith.constant 0 : index
    %c0_4 = arith.constant 0 : index
    %c0_5 = arith.constant 0 : index
    %4 = vector.load %arg3[%c0_3, %c0_4, %c0_5] : memref<2x8x128xf32, #tpu.memory_space<vmem>>, vector<2x8x128xf32>
    %5 = arith.negf %3 : vector<2x8x128xf32>
    %6 = math.exp %5 : vector<2x8x128xf32>
    %cst = arith.constant 1.000000e+00 : f32
    %7 = vector.broadcast %cst : f32 to vector<2x8x128xf32>
    %8 = arith.addf %7, %6 : vector<2x8x128xf32>
    %9 = arith.divf %7, %8 : vector<2x8x128xf32>
    %c0_6 = arith.constant 0 : index
    %c0_7 = arith.constant 0 : index
    %c0_8 = arith.constant 0 : index
    %10 = vector.load %arg4[%c0_6, %c0_7, %c0_8] : memref<1x2x128xf32, #tpu.memory_space<vmem>>, vector<1x2x128xf32>
    %11 = vector.shape_cast %10 : vector<1x2x128xf32> to vector<2x128xf32>
    %12 = arith.mulf %9, %4 : vector<2x8x128xf32>
    %cst_9 = arith.constant dense<0.000000e+00> : vector<2x128xf32>
    %13 = vector.multi_reduction <add>, %12, %cst_9 [1] : vector<2x8x128xf32> to vector<2x128xf32>
    %14 = arith.addf %11, %13 : vector<2x128xf32>
    %c0_10 = arith.constant 0 : index
    %c0_11 = arith.constant 0 : index
    %c0_12 = arith.constant 0 : index
    %15 = vector.load %arg4[%c0_10, %c0_11, %c0_12] : memref<1x2x128xf32, #tpu.memory_space<vmem>>, vector<1x2x128xf32>
    %16 = vector.shape_cast %15 : vector<1x2x128xf32> to vector<2x128xf32>
    %17 = vector.shape_cast %14 : vector<2x128xf32> to vector<1x2x128xf32>
    tpu.vector_store %arg4[%c0_10, %c0_11, %c0_12], %17 {strides = array<i32>} : memref<1x2x128xf32, #tpu.memory_space<vmem>>, vector<1x2x128xf32>,
    %c0_13 = arith.constant 0 : index
    %c0_14 = arith.constant 0 : index
    %c0_15 = arith.constant 0 : index
    %18 = vector.load %arg5[%c0_13, %c0_14, %c0_15] : memref<1x2x128xf32, #tpu.memory_space<vmem>>, vector<1x2x128xf32>
    %19 = vector.shape_cast %18 : vector<1x2x128xf32> to vector<2x128xf32>
    %cst_16 = arith.constant dense<0.000000e+00> : vector<2x128xf32>
    %20 = vector.multi_reduction <add>, %9, %cst_16 [1] : vector<2x8x128xf32> to vector<2x128xf32>
    %21 = arith.addf %19, %20 : vector<2x128xf32>
    %c0_17 = arith.constant 0 : index
    %c0_18 = arith.constant 0 : index
    %c0_19 = arith.constant 0 : index
    %22 = vector.load %arg5[%c0_17, %c0_18, %c0_19] : memref<1x2x128xf32, #tpu.memory_space<vmem>>, vector<1x2x128xf32>
    %23 = vector.shape_cast %22 : vector<1x2x128xf32> to vector<2x128xf32>
    %24 = vector.shape_cast %21 : vector<2x128xf32> to vector<1x2x128xf32>
    tpu.vector_store %arg5[%c0_17, %c0_18, %c0_19], %24 {strides = array<i32>} : memref<1x2x128xf32, #tpu.memory_space<vmem>>, vector<1x2x128xf32>,
    %c0_20 = arith.constant 0 : index
    %c0_21 = arith.constant 0 : index
    %c0_22 = arith.constant 0 : index
    %25 = vector.load %arg6[%c0_20, %c0_21, %c0_22] : memref<1x2x128xf32, #tpu.memory_space<vmem>>, vector<1x2x128xf32>
    %26 = vector.shape_cast %25 : vector<1x2x128xf32> to vector<2x128xf32>
    %cst_23 = arith.constant dense<0.000000e+00> : vector<2x128xf32>
    %27 = vector.multi_reduction <add>, %4, %cst_23 [1] : vector<2x8x128xf32> to vector<2x128xf32>
    %28 = arith.addf %26, %27 : vector<2x128xf32>
    %c0_24 = arith.constant 0 : index
    %c0_25 = arith.constant 0 : index
    %c0_26 = arith.constant 0 : index
    %29 = vector.load %arg6[%c0_24, %c0_25, %c0_26] : memref<1x2x128xf32, #tpu.memory_space<vmem>>, vector<1x2x128xf32>
    %30 = vector.shape_cast %29 : vector<1x2x128xf32> to vector<2x128xf32>
    %31 = vector.shape_cast %28 : vector<2x128xf32> to vector<1x2x128xf32>
    tpu.vector_store %arg6[%c0_24, %c0_25, %c0_26], %31 {strides = array<i32>} : memref<1x2x128xf32, #tpu.memory_space<vmem>>, vector<1x2x128xf32>,
    return
  }
  func.func @transform_0(%arg0: i32, %arg1: i32) -> (i32, i32, i32) {
    %c1_i32 = arith.constant 1 : i32
    %0 = arith.muli %arg0, %c1_i32 : i32
    %1 = arith.addi %0, %arg1 : i32
    %c0_i32 = arith.constant 0 : i32
    %c0_i32_0 = arith.constant 0 : i32
    %c0_i32_1 = arith.constant 0 : i32
    return %c0_i32, %1, %c0_i32_0 : i32, i32, i32
  }
  func.func @transform_1(%arg0: i32, %arg1: i32) -> (i32, i32, i32) {
    %c1_i32 = arith.constant 1 : i32
    %0 = arith.muli %arg0, %c1_i32 : i32
    %1 = arith.addi %0, %arg1 : i32
    %c0_i32 = arith.constant 0 : i32
    %c0_i32_0 = arith.constant 0 : i32
    %c0_i32_1 = arith.constant 0 : i32
    return %c0_i32, %1, %c0_i32_0 : i32, i32, i32
  }
  func.func @transform_2(%arg0: i32, %arg1: i32) -> (i32, i32, i32) {
    %c0_i32 = arith.constant 0 : i32
    %c0_i32_0 = arith.constant 0 : i32
    %c0_i32_1 = arith.constant 0 : i32
    return %arg0, %c0_i32, %c0_i32_0 : i32, i32, i32
  }
  func.func @transform_3(%arg0: i32, %arg1: i32) -> (i32, i32, i32) {
    %c0_i32 = arith.constant 0 : i32
    %c0_i32_0 = arith.constant 0 : i32
    %c0_i32_1 = arith.constant 0 : i32
    return %arg0, %c0_i32, %c0_i32_0 : i32, i32, i32
  }
  func.func @transform_4(%arg0: i32, %arg1: i32) -> (i32, i32, i32) {
    %c0_i32 = arith.constant 0 : i32
    %c0_i32_0 = arith.constant 0 : i32
    %c0_i32_1 = arith.constant 0 : i32
    return %arg0, %c0_i32, %c0_i32_0 : i32, i32, i32
  }
}

</mosaic_0001>

<llo_original>
// kernel: tpu_custom_call.1
$region0: #{tpu_custom_call.1}
  #allocation0 [shape = 'u32[]', space=smem, size = 0x4, offset = 0x4, fixed_abs, tag = 'smem constant byte address 0x4 - core index']
  #allocation1 [shape = 'u32[144,128]{1,0:T(1,128)}', space=vmem, size = 0x12000, scoped, tag = 'internal scratch']
  %s0 = inlined_call_operand.hbm [shape: f32[2,8,128], index: 0, kind: input, shape index: {}]
  %s1 = inlined_call_operand.hbm [shape: f32[2,8,128], index: 1, kind: input, shape index: {}]
  %s2 = inlined_call_operand.hbm [shape: f32[1,2,128], index: 2, kind: output, shape index: {0}]
  %s3 = inlined_call_operand.hbm [shape: f32[1,2,128], index: 3, kind: output, shape index: {1}]
  %s4 = inlined_call_operand.hbm [shape: f32[1,2,128], index: 4, kind: output, shape index: {2}]
  %5 = xla_tuple %s2, %s3, %s4
  %s6 = sld [smem:[#allocation0]]
  $region46: #{tpu_custom_call.1} parent=0
    _
  %s8 = ssub.s32 1, %s6
  %s9 = scalar_select 0, %s8, %s6
  $region1: #{tpu_custom_call.1} parent=0
    #allocation2 [shape = 'u8[8192]{0}', space=vmem, size = 0x2000, scoped, tag = 'input window, operand 0, single buffered']
    #allocation3 [shape = 's32[1]{0}', space=sflag, size = 0x4, scoped, tag = 'scoped memory for tpu_custom_call.1']
    #allocation4 [shape = 's32[1]{0}', space=sflag, size = 0x4, scoped, tag = 'scoped memory for tpu_custom_call.1']
    #allocation5 [shape = 'u8[8192]{0}', space=vmem, size = 0x2000, scoped, tag = 'input window, operand 1, single buffered']
    #allocation6 [shape = 's32[1]{0}', space=sflag, size = 0x4, scoped, tag = 'scoped memory for tpu_custom_call.1']
    #allocation7 [shape = 'u8[1024]{0}', space=vmem, size = 0x400, scoped, tag = 'output window, operand 0, single buffered']
    #allocation8 [shape = 'u8[1024]{0}', space=vmem, size = 0x400, scoped, tag = 'output window, operand 1, single buffered']
    #allocation9 [shape = 's32[1]{0}', space=sflag, size = 0x4, scoped, tag = 'scoped memory for tpu_custom_call.1']
    #allocation10 [shape = 'u8[1024]{0}', space=vmem, size = 0x400, scoped, tag = 'output window, operand 2, single buffered']
    %10 = vsyncpa [#allocation3], 0
    %11 = vsyncpa [#allocation6], 0
    %12 = vsyncpa [#allocation4], 0
    %13 = vsyncpa [#allocation9], 0
    // Predicated region
    $region2: #{tpu_custom_call.1} parent=1 // pred_check
      _
    $region3: #{tpu_custom_call.1} parent=1 // pred_check_branch
      %15 = sbr.rel (0) target = $region5
    $region4: #{tpu_custom_call.1} parent=1 // pred_region
      %s16 = sadd.s32 0, 0
      %s18 = ssub.s32 256, 256
      %19 = vsyncadd [#allocation3], %s18
      %s20 = smul.addr %s16, 128
      %s21 = scalar_lea.hbm %s0, %s20
      %s22 = sshll.u32 [#allocation2], 4
      %s23 = int_to_ptr.vmem [resolvable:$true] %s22
      %28 = dma.hbm_to_vmem [thread:$0]  %s21, 256, %s23, [#allocation3], 128, 128, 8
    $region5: #{tpu_custom_call.1} parent=1 // pred_fallthru
      _
    // Predicated region
    $region6: #{tpu_custom_call.1} parent=1 // pred_check
      _
    $region7: #{tpu_custom_call.1} parent=1 // pred_check_branch
      %30 = sbr.rel (0) target = $region9
    $region8: #{tpu_custom_call.1} parent=1 // pred_region
      %s31 = sadd.s32 0, 0
      %s33 = ssub.s32 256, 256
      %34 = vsyncadd [#allocation6], %s33
      %s35 = smul.addr %s31, 128
      %s36 = scalar_lea.hbm %s1, %s35
      %s37 = sshll.u32 [#allocation5], 4
      %s38 = int_to_ptr.vmem [resolvable:$true] %s37
      %43 = dma.hbm_to_vmem [thread:$0]  %s36, 256, %s38, [#allocation6], 128, 128, 8
    $region9: #{tpu_custom_call.1} parent=1 // pred_fallthru
      _
    // Predicated region
    $region10: #{tpu_custom_call.1} parent=1 // pred_check
      _
    $region11: #{tpu_custom_call.1} parent=1 // pred_check_branch
      %45 = sbr.rel (0) target = $region13
    $region12: #{tpu_custom_call.1} parent=1 // pred_region
      %46 = dma.done [#allocation3], 256
    $region13: #{tpu_custom_call.1} parent=1 // pred_fallthru
      _
    // Predicated region
    $region14: #{tpu_custom_call.1} parent=1 // pred_check
      _
    $region15: #{tpu_custom_call.1} parent=1 // pred_check_branch
      %48 = sbr.rel (0) target = $region17
    $region16: #{tpu_custom_call.1} parent=1 // pred_region
      %49 = dma.done [#allocation6], 256
    $region17: #{tpu_custom_call.1} parent=1 // pred_fallthru
      _
    %s50 = sadd.s32 0, 0
    %s51 = sadd.s32 0, 0
    %p52 = scmp.eq.s32.totalorder 0, 0
    // Predicated region
    $region18: #{tpu_custom_call.1} parent=1 // pred_check
      %p53 = pneg %p52
    $region19: #{tpu_custom_call.1} parent=1 // pred_check_branch
      %55 = sbr.rel (%p53) target = $region21
    $region20: #{tpu_custom_call.1} parent=1 // pred_region
      %56 = vst [vmem:[#allocation7] sm:$0x3] 0.0
      %57 = vst [vmem:[#allocation8] sm:$0x3] 0.0
      %58 = vst [vmem:[#allocation10] sm:$0x3] 0.0
    $region21: #{tpu_custom_call.1} parent=1 // pred_fallthru
      _
    %v59 = vld [vmem:[#allocation2] sm:$0xff]
    %v60 = vld [vmem:[#allocation2 + $0x8] sm:$0xff]
    %v61 = vld [vmem:[#allocation5] sm:$0xff]
    %v62 = vld [vmem:[#allocation5 + $0x8] sm:$0xff]
    %v63 = vxor.u32 %v59, 2147483648
    %v64 = vxor.u32 %v60, 2147483648
    %v65 = vmul.f32 %v63, 1.442695
    %v66 = vpow.pop %v65
    %v67 = vmul.f32 %v64, 1.442695
    %v68 = vpow.pop %v67
    %v69 = vadd.f32 %v66, 1.0
    %v70 = vadd.f32 %v68, 1.0
    %v71 = vrcp.pop %v69
    %v72 = vmul.f32 1.0, %v71
    %v73 = vrcp.pop %v70
    %v74 = vmul.f32 1.0, %v73
    %v75 = vld [vmem:[#allocation7] sm:$0x3]
    %v76 = vmul.f32 %v72, %v61
    %v77 = vmul.f32 %v74, %v62
    %v78 = vrot.slane %v76, 4
    %v79 = vadd.f32 %v76, %v78
    %v80 = vrot.slane %v79, 2
    %v81 = vadd.f32 %v79, %v80
    %v82 = vrot.slane %v81, 1
    %v83 = vadd.f32 %v81, %v82
    %v84 = vrot.slane %v77, 4
    %v85 = vadd.f32 %v77, %v84
    %v86 = vrot.slane %v85, 2
    %v87 = vadd.f32 %v85, %v86
    %v88 = vrot.slane %v87, 1
    %v89 = vadd.f32 %v87, %v88
    %vm92 = vcmask 1041409
    %v93 = vsel %vm92, %v89, %v83
    %v95 = vadd.f32 %v75, %v93
    %96 = vst [vmem:[#allocation7] sm:$0x3] %v95
    %v97 = vld [vmem:[#allocation8] sm:$0x3]
    %v98 = vrot.slane %v72, 4
    %v99 = vadd.f32 %v72, %v98
    %v100 = vrot.slane %v99, 2
    %v101 = vadd.f32 %v99, %v100
    %v102 = vrot.slane %v101, 1
    %v103 = vadd.f32 %v101, %v102
    %v104 = vrot.slane %v74, 4
    %v105 = vadd.f32 %v74, %v104
    %v106 = vrot.slane %v105, 2
    %v107 = vadd.f32 %v105, %v106
    %v108 = vrot.slane %v107, 1
    %v109 = vadd.f32 %v107, %v108
    %v112 = vsel %vm92, %v109, %v103
    %v114 = vadd.f32 %v97, %v112
    %115 = vst [vmem:[#allocation8] sm:$0x3] %v114
    %v116 = vld [vmem:[#allocation10] sm:$0x3]
    %v117 = vrot.slane %v61, 4
    %v118 = vadd.f32 %v61, %v117
    %v119 = vrot.slane %v118, 2
    %v120 = vadd.f32 %v118, %v119
    %v121 = vrot.slane %v120, 1
    %v122 = vadd.f32 %v120, %v121
    %v123 = vrot.slane %v62, 4
    %v124 = vadd.f32 %v62, %v123
    %v125 = vrot.slane %v124, 2
    %v126 = vadd.f32 %v124, %v125
    %v127 = vrot.slane %v126, 1
    %v128 = vadd.f32 %v126, %v127
    %v131 = vsel %vm92, %v128, %v122
    %v133 = vadd.f32 %v116, %v131
    %134 = vst [vmem:[#allocation10] sm:$0x3] %v133
    // Predicated region
    $region22: #{tpu_custom_call.1} parent=1 // pred_check
      _
    $region23: #{tpu_custom_call.1} parent=1 // pred_check_branch
      %136 = sbr.rel (0) target = $region25
    $region24: #{tpu_custom_call.1} parent=1 // pred_region
      %s138 = ssub.s32 32, 32
      %139 = vsyncadd [#allocation4], %s138
      %s141 = sshll.u32 [#allocation7], 4
      %s142 = int_to_ptr.vmem [resolvable:$true] %s141
      %144 = dma.vmem_to_hbm [thread:$0]  %s142, 32, %s2, [#allocation4]
    $region25: #{tpu_custom_call.1} parent=1 // pred_fallthru
      _
    // Predicated region
    $region26: #{tpu_custom_call.1} parent=1 // pred_check
      _
    $region27: #{tpu_custom_call.1} parent=1 // pred_check_branch
      %146 = sbr.rel (0) target = $region29
    $region28: #{tpu_custom_call.1} parent=1 // pred_region
      %s148 = ssub.s32 32, 32
      %149 = vsyncadd [#allocation9], %s148
      %s151 = sshll.u32 [#allocation8], 4
      %s152 = int_to_ptr.vmem [resolvable:$true] %s151
      %154 = dma.vmem_to_hbm [thread:$0]  %s152, 32, %s3, [#allocation9]
    $region29: #{tpu_custom_call.1} parent=1 // pred_fallthru
      _
    // Predicated region
    $region30: #{tpu_custom_call.1} parent=1 // pred_check
      _
    $region31: #{tpu_custom_call.1} parent=1 // pred_check_branch
      %156 = sbr.rel (0) target = $region33
    $region32: #{tpu_custom_call.1} parent=1 // pred_region
      %s158 = ssub.s32 32, 32
      %159 = vsyncadd [#allocation9], %s158
      %s161 = sshll.u32 [#allocation10], 4
      %s162 = int_to_ptr.vmem [resolvable:$true] %s161
      %164 = dma.vmem_to_hbm [thread:$0]  %s162, 32, %s4, [#allocation9]
    $region33: #{tpu_custom_call.1} parent=1 // pred_fallthru
      _
    // Predicated region
    $region34: #{tpu_custom_call.1} parent=1 // pred_check
      _
    $region35: #{tpu_custom_call.1} parent=1 // pred_check_branch
      %166 = sbr.rel (0) target = $region37
    $region36: #{tpu_custom_call.1} parent=1 // pred_region
      %167 = dma.done [#allocation4], 32
    $region37: #{tpu_custom_call.1} parent=1 // pred_fallthru
      _
    // Predicated region
    $region38: #{tpu_custom_call.1} parent=1 // pred_check
      _
    $region39: #{tpu_custom_call.1} parent=1 // pred_check_branch
      %169 = sbr.rel (0) target = $region41
    $region40: #{tpu_custom_call.1} parent=1 // pred_region
      %170 = dma.done [#allocation9], 32
    $region41: #{tpu_custom_call.1} parent=1 // pred_fallthru
      _
    // Predicated region
    $region42: #{tpu_custom_call.1} parent=1 // pred_check
      _
    $region43: #{tpu_custom_call.1} parent=1 // pred_check_branch
      %172 = sbr.rel (0) target = $region45
    $region44: #{tpu_custom_call.1} parent=1 // pred_region
      %173 = dma.done [#allocation9], 32
    $region45: #{tpu_custom_call.1} parent=1 // pred_fallthru
      _
    %174 = vsyncpa [#allocation3], 1
    %175 = vsyncpa [#allocation6], 1
    %176 = vsyncpa [#allocation4], 1
    %177 = vsyncpa [#allocation9], 1

</llo_original>
